<compile_context>
chip_gen: v7x
topology: tpu7x:2x2x1
jax: 0.10.0
libtpu: 0.0.40
codegen_flags: <defaults>
</compile_context>

<pallas_src>
import functools

import jax
import jax.numpy as jnp
import numpy as np
from jax.experimental import pallas as pl
from jax.experimental.pallas import tpu as pltpu


# ---------------------------------------------------------------------------
# Kernel: one batch tile per grid step; packed twin-tower weights live in VMEM
# as full, grid-invariant blocks.
# ---------------------------------------------------------------------------
def _critic_kernel(sa_ref, w_pre_ref, w_h1s_ref, w_h1a_ref, w_h2_ref,
                   w_fc_ref, bias_ref, q_ref, *, pre2, hid2, feat2):
    x = sa_ref[...]                       # (tb, state+action), bf16 or f32

    pre_b = bias_ref[0:1, :pre2]          # biases stay f32
    h1_b = bias_ref[1:2, :hid2]
    h2_b = bias_ref[2:3, :feat2]
    fc_b = bias_ref[3:4, :2]

    # Layer 1 (both towers' state_preprocess at once): the action rows of
    # w_pre are zero, so the packed matmul equals state @ pre_w per tower.
    s1 = jnp.maximum(
        jnp.dot(x, w_pre_ref[...], preferred_element_type=jnp.float32) + pre_b,
        0.0)                              # (tb, 2*pre), f32

    # Head layer 1 on cat([s1_i, action]) per tower, as exact packed matmuls:
    #   block-diag state-part on s1  +  zero-padded action-part on x.
    h = jnp.maximum(
        jnp.dot(s1, w_h1s_ref[...], preferred_element_type=jnp.float32)
        + jnp.dot(x, w_h1a_ref[...], preferred_element_type=jnp.float32)
        + h1_b, 0.0)                      # (tb, 2*hidden), f32

    # Head layer 2 (block-diagonal, both towers).
    f = jnp.maximum(
        jnp.dot(h, w_h2_ref[...], preferred_element_type=jnp.float32) + h2_b,
        0.0)                              # (tb, 2*feature), f32

    # Twin fc heads fused into one (2*feature, 2) block-diagonal matmul.
    q_ref[...] = (jnp.dot(f, w_fc_ref[...], preferred_element_type=jnp.float32)
                  + fc_b).astype(q_ref.dtype)


def _round_up(x, m):
    return int(pl.cdiv(int(x), m)) * m


def _choose_tile(batch, tile_batch):
    b8 = _round_up(batch, 8)
    tb = min(_round_up(tile_batch, 8), b8)
    # v7x has two TensorCores: for large batches make sure the "parallel"
    # grid axis has >= 2 tiles so both cores get work.  Small batches keep a
    # single tile (v5e/v6e grids are serial; extra steps are pure overhead).
    if b8 // tb < 2 and b8 >= 2048:
        tb = _round_up(pl.cdiv(b8, 2), 8)
    b_pad = _round_up(batch, tb)
    return tb, b_pad


def critic_forward(state, action, packed, *, tile_batch=4096,
                   compute_dtype=jnp.bfloat16):
    """Fused twin-critic forward. Returns (q1, q2), each (batch, 1) float32."""
    w_pre, w_h1s, w_h1a, w_h2, w_fc, bias = packed
    batch = state.shape[0]
    in_dim = w_pre.shape[0]                       # state_dim + action_dim
    assert state.shape[1] + action.shape[1] == in_dim
    pre2, hid2, feat2 = w_pre.shape[1], w_h1s.shape[1], w_h2.shape[1]

    cdt = jnp.dtype(compute_dtype)
    # One contiguous [state | action] slab (one input DMA per batch tile) in
    # the storage dtype.  Only the slabs that multiply it are stored in cdt;
    # everything downstream (activations, other weights, biases) stays f32.
    sa = jnp.concatenate([state, action], axis=1).astype(cdt)
    w_pre_c = w_pre.astype(cdt)
    w_h1a_c = w_h1a.astype(cdt)
    w_h1s_f = w_h1s.astype(jnp.float32)
    w_h2_f = w_h2.astype(jnp.float32)
    w_fc_f = w_fc.astype(jnp.float32)
    bias_f = bias.astype(jnp.float32)

    tb, b_pad = _choose_tile(batch, tile_batch)
    if b_pad != batch:
        sa = jnp.pad(sa, ((0, b_pad - batch), (0, 0)))

    kernel = functools.partial(_critic_kernel, pre2=pre2, hid2=hid2,
                               feat2=feat2)

    flops = int(2 * b_pad * (in_dim * pre2 + pre2 * hid2 + in_dim * hid2
                             + hid2 * feat2 + feat2 * 2))
    bytes_accessed = int(
        b_pad * in_dim * cdt.itemsize            # packed input
        + b_pad * 2 * 4                          # fused (batch, 2) output
        + (w_pre_c.size + w_h1a_c.size) * cdt.itemsize
        + (w_h1s_f.size + w_h2_f.size + w_fc_f.size + bias_f.size) * 4)

    def resident(shape):
        return pl.BlockSpec(shape, lambda i: (0, 0))   # grid-invariant

    q12 = pl.pallas_call(
        kernel,
        out_shape=jax.ShapeDtypeStruct((b_pad, 2), jnp.float32),
        grid_spec=pltpu.PrefetchScalarGridSpec(
            num_scalar_prefetch=0,
            grid=(b_pad // tb,),
            in_specs=[
                # NOTE: add pipeline_mode=pl.Buffered(3) here if profiling
                # ever shows exposed input DMA at large tiles.
                pl.BlockSpec((tb, in_dim), lambda i: (i, 0)),
                resident(w_pre_c.shape),
                resident(w_h1s_f.shape),
                resident(w_h1a_c.shape),
                resident(w_h2_f.shape),
                resident(w_fc_f.shape),
                resident(bias_f.shape),
            ],
            out_specs=pl.BlockSpec((tb, 2), lambda i: (i, 0)),
        ),
        compiler_params=pltpu.CompilerParams(
            dimension_semantics=("parallel",),   # megacore / v7x 2-TC sharding
            vmem_limit_bytes=32 * 1024 * 1024,   # ample on every generation
        ),
        cost_estimate=pl.CostEstimate(flops=flops, transcendentals=0,
                                      bytes_accessed=bytes_accessed),
    )(sa, w_pre_c, w_h1s_f, w_h1a_c, w_h2_f, w_fc_f, bias_f)

    q12 = q12[:batch]
    return q12[:, 0:1], q12[:, 1:2]


# ---------------------------------------------------------------------------
# Parameter construction + packing.
# ---------------------------------------------------------------------------
def init_raw_params(key, state_dim, action_dim, pre_dim, hidden, feature_dim,
                    tied=True):
    """Per-tower raw (in, out) weights, torch nn.Linear-style init.
    tied=True mirrors the module right after __init__ (trunk 2 is a deepcopy
    of trunk 1); tied=False simulates trained, diverged twin critics."""
    def linear(k, fan_in, fan_out):
        kw, kb = jax.random.split(k)
        bound = 1.0 / np.sqrt(fan_in)
        w = jax.random.uniform(kw, (fan_in, fan_out), jnp.float32, -bound, bound)
        b = jax.random.uniform(kb, (fan_out,), jnp.float32, -bound, bound)
        return w, b

    ks = jax.random.split(key, 8)
    pw1, pb1 = linear(ks[0], state_dim, pre_dim)
    h1w1, h1b1 = linear(ks[1], pre_dim + action_dim, hidden)
    h2w1, h2b1 = linear(ks[2], hidden, feature_dim)
    fw1, fb1 = linear(ks[3], feature_dim, 1)
    fw2, fb2 = linear(ks[4], feature_dim, 1)
    if tied:
        pw2, pb2, h1w2, h1b2, h2w2, h2b2 = pw1, pb1, h1w1, h1b1, h2w1, h2b1
    else:
        pw2, pb2 = linear(ks[5], state_dim, pre_dim)
        h1w2, h1b2 = linear(ks[6], pre_dim + action_dim, hidden)
        h2w2, h2b2 = linear(ks[7], hidden, feature_dim)
    return (pw1, pb1, h1w1, h1b1, h2w1, h2b1, fw1, fb1,
            pw2, pb2, h1w2, h1b2, h2w2, h2b2, fw2, fb2)


def pack_params(raw):
    """Pack both towers' weights into lane-fused / block-diagonal slabs."""
    (pw1, pb1, h1w1, h1b1, h2w1, h2b1, fw1, fb1,
     pw2, pb2, h1w2, h1b2, h2w2, h2b2, fw2, fb2) = raw
    state_dim, pre = pw1.shape
    cat_in, hidden = h1w1.shape
    action_dim = cat_in - pre
    feat = h2w1.shape[1]

    def hstack2(a, b):
        return jnp.concatenate([a, b], axis=1)

    def blockdiag(a, b):
        top = jnp.concatenate(
            [a, jnp.zeros((a.shape[0], b.shape[1]), a.dtype)], axis=1)
        bot = jnp.concatenate(
            [jnp.zeros((b.shape[0], a.shape[1]), b.dtype), b], axis=1)
        return jnp.concatenate([top, bot], axis=0)

    # (state+action, 2*pre): action rows zero -> packed_x @ w_pre == s @ pre_w
    w_pre = jnp.concatenate(
        [hstack2(pw1, pw2), jnp.zeros((action_dim, 2 * pre), pw1.dtype)],
        axis=0)
    # (2*pre, 2*hidden): block-diagonal state-part of head layer 1
    w_h1s = blockdiag(h1w1[:pre], h1w2[:pre])
    # (state+action, 2*hidden): state rows zero -> packed_x @ w_h1a == a @ W_a
    w_h1a = jnp.concatenate(
        [jnp.zeros((state_dim, 2 * hidden), h1w1.dtype),
         hstack2(h1w1[pre:], h1w2[pre:])], axis=0)
    w_h2 = blockdiag(h2w1, h2w2)          # (2*hidden, 2*feature)
    w_fc = blockdiag(fw1, fw2)            # (2*feature, 2)

    width = max(2 * pre, 2 * hidden, 2 * feat, 2)

    def row(v):
        return jnp.pad(v, (0, width - v.shape[0]))[None, :]

    bias = jnp.concatenate(
        [row(jnp.concatenate([pb1, pb2])),
         row(jnp.concatenate([h1b1, h1b2])),
         row(jnp.concatenate([h2b1, h2b2])),
         row(jnp.concatenate([fb1, fb2]))], axis=0)

    return (w_pre, w_h1s, w_h1a, w_h2, w_fc, bias)


def critic_reference(state, action, raw):
    """Pure-JAX reference mirroring the PyTorch forward (two full towers)."""
    (pw1, pb1, h1w1, h1b1, h2w1, h2b1, fw1, fb1,
     pw2, pb2, h1w2, h1b2, h2w2, h2b2, fw2, fb2) = raw

    def tower(pw, pb, h1w, h1b, h2w, h2b, fw, fb):
        s1 = jnp.maximum(state @ pw + pb, 0.0)
        sa = jnp.concatenate([s1, action], axis=1)   # torch.cat([s1, a], 1)
        h = jnp.maximum(sa @ h1w + h1b, 0.0)
        f = jnp.maximum(h @ h2w + h2b, 0.0)
        return f @ fw + fb

    q1 = tower(pw1, pb1, h1w1, h1b1, h2w1, h2b1, fw1, fb1)
    q2 = tower(pw2, pb2, h1w2, h1b2, h2w2, h2b2, fw2, fb2)
    return q1, q2


if __name__ == "__main__":
    BATCH = 8
    STATE_DIM = 24
    ACTION_DIM = 8
    PRE_DIM = 32
    HIDDEN = 32
    FEATURE_DIM = 32

    root = jax.random.PRNGKey(0)
    k_s, k_a, k_p, k_pu, k_s2, k_a2, k_s3, k_a3 = jax.random.split(root, 8)

    state = jax.random.normal(k_s, (BATCH, STATE_DIM), jnp.float32)
    action = jax.random.normal(k_a, (BATCH, ACTION_DIM), jnp.float32)

    # --- tied trunks (module as constructed via deepcopy), f32 path --------
    raw_tied = init_raw_params(k_p, STATE_DIM, ACTION_DIM, PRE_DIM, HIDDEN,
                               FEATURE_DIM, tied=True)
    packed_tied = pack_params(raw_tied)
    q1, q2 = critic_forward(state, action, packed_tied,
                            compute_dtype=jnp.float32)
    jax.block_until_ready((q1, q2))
    q1_ref, q2_ref = critic_reference(state, action, raw_tied)
    np.testing.assert_allclose(np.asarray(q1), np.asarray(q1_ref),
                               rtol=1e-5, atol=1e-5)
    np.testing.assert_allclose(np.asarray(q2), np.asarray(q2_ref),
                               rtol=1e-5, atol=1e-5)
    assert q1.shape == (BATCH, 1) and q2.shape == (BATCH, 1)

    # --- default bf16 storage path (f32 accumulation), loose tolerance -----
    q1h, q2h = critic_forward(state, action, packed_tied)
    jax.block_until_ready((q1h, q2h))
    np.testing.assert_allclose(np.asarray(q1h), np.asarray(q1_ref),
                               rtol=3e-2, atol=3e-2)
    np.testing.assert_allclose(np.asarray(q2h), np.asarray(q2_ref),
                               rtol=3e-2, atol=3e-2)

    # --- untied trunks (diverged twin critics after training), f32 ---------
    raw_untied = init_raw_params(k_pu, STATE_DIM, ACTION_DIM, PRE_DIM, HIDDEN,
                                 FEATURE_DIM, tied=False)
    packed_untied = pack_params(raw_untied)
    q1u, q2u = critic_forward(state, action, packed_untied,
                              compute_dtype=jnp.float32)
    jax.block_until_ready((q1u, q2u))
    q1u_ref, q2u_ref = critic_reference(state, action, raw_untied)
    np.testing.assert_allclose(np.asarray(q1u), np.asarray(q1u_ref),
                               rtol=1e-5, atol=1e-5)
    np.testing.assert_allclose(np.asarray(q2u), np.asarray(q2u_ref),
                               rtol=1e-5, atol=1e-5)

    # --- multi-tile batch grid (padding + pipelined batch axis), f32 -------
    B2 = 300
    state2 = jax.random.normal(k_s2, (B2, STATE_DIM), jnp.float32)
    action2 = jax.random.normal(k_a2, (B2, ACTION_DIM), jnp.float32)
    q1b, q2b = critic_forward(state2, action2, packed_untied, tile_batch=128,
                              compute_dtype=jnp.float32)
    jax.block_until_ready((q1b, q2b))
    state, action = state2, action2        # reference closes over these names
    q1b_ref, q2b_ref = critic_reference(state2, action2, raw_untied)
    np.testing.assert_allclose(np.asarray(q1b), np.asarray(q1b_ref),
                               rtol=1e-5, atol=1e-5)
    np.testing.assert_allclose(np.asarray(q2b), np.asarray(q2b_ref),
                               rtol=1e-5, atol=1e-5)

    # --- large batch: exercises the 2-tile split for v7x dual-TC sharding --
    B3 = 2048
    state3 = jax.random.normal(k_s3, (B3, STATE_DIM), jnp.float32)
    action3 = jax.random.normal(k_a3, (B3, ACTION_DIM), jnp.float32)
    q1c, q2c = critic_forward(state3, action3, packed_tied)   # bf16 default
    jax.block_until_ready((q1c, q2c))
    state, action = state3, action3
    q1c_ref, q2c_ref = critic_reference(state3, action3, raw_tied)
    np.testing.assert_allclose(np.asarray(q1c), np.asarray(q1c_ref),
                               rtol=3e-2, atol=3e-2)
    np.testing.assert_allclose(np.asarray(q2c), np.asarray(q2c_ref),
                               rtol=3e-2, atol=3e-2)

    print("KERNEL_OK")
</pallas_src>

<mosaic_0001>
module attributes {stable_mosaic.version = 11 : i64} {
  func.func @_critic_kernel(%arg0: i32, %arg1: memref<8x32xf32, #tpu.memory_space<vmem>>, %arg2: memref<32x64xf32, #tpu.memory_space<vmem>>, %arg3: memref<64x64xf32, #tpu.memory_space<vmem>>, %arg4: memref<32x64xf32, #tpu.memory_space<vmem>>, %arg5: memref<64x64xf32, #tpu.memory_space<vmem>>, %arg6: memref<64x2xf32, #tpu.memory_space<vmem>>, %arg7: memref<4x64xf32, #tpu.memory_space<vmem>>, %arg8: memref<8x2xf32, #tpu.memory_space<vmem>>) attributes {dimension_semantics = [#tpu.dimension_semantics<parallel>], iteration_bounds = array<i64: 1>, scalar_prefetch = 0 : i64, scratch_operands = 0 : i64, tpu.core_type = #tpu.core_type<tc>, window_params = [{transform_indices = @transform_0, window_bounds = array<i64: 8, 32>}, {pipeline_mode = #tpu.pipeline_mode<synchronous>, transform_indices = @transform_1, window_bounds = array<i64: 32, 64>}, {pipeline_mode = #tpu.pipeline_mode<synchronous>, transform_indices = @transform_2, window_bounds = array<i64: 64, 64>}, {pipeline_mode = #tpu.pipeline_mode<synchronous>, transform_indices = @transform_3, window_bounds = array<i64: 32, 64>}, {pipeline_mode = #tpu.pipeline_mode<synchronous>, transform_indices = @transform_4, window_bounds = array<i64: 64, 64>}, {pipeline_mode = #tpu.pipeline_mode<synchronous>, transform_indices = @transform_5, window_bounds = array<i64: 64, 2>}, {pipeline_mode = #tpu.pipeline_mode<synchronous>, transform_indices = @transform_6, window_bounds = array<i64: 4, 64>}, {transform_indices = @transform_7, window_bounds = array<i64: 8, 2>}]} {
    %c0 = arith.constant 0 : index
    %c0_0 = arith.constant 0 : index
    %0 = vector.load %arg1[%c0, %c0_0] : memref<8x32xf32, #tpu.memory_space<vmem>>, vector<8x32xf32>
    %c0_1 = arith.constant 0 : index
    %c0_2 = arith.constant 0 : index
    %1 = vector.load %arg7[%c0_1, %c0_2] : memref<4x64xf32, #tpu.memory_space<vmem>>, vector<1x64xf32>
    %c1 = arith.constant 1 : index
    %c0_3 = arith.constant 0 : index
    %2 = vector.load %arg7[%c1, %c0_3] : memref<4x64xf32, #tpu.memory_space<vmem>>, vector<1x64xf32>
    %c2 = arith.constant 2 : index
    %c0_4 = arith.constant 0 : index
    %3 = vector.load %arg7[%c2, %c0_4] : memref<4x64xf32, #tpu.memory_space<vmem>>, vector<1x64xf32>
    %c3 = arith.constant 3 : index
    %c0_5 = arith.constant 0 : index
    %4 = vector.load %arg7[%c3, %c0_5] : memref<4x64xf32, #tpu.memory_space<vmem>>, vector<1x2xf32>
    %c0_6 = arith.constant 0 : index
    %c0_7 = arith.constant 0 : index
    %5 = vector.load %arg2[%c0_6, %c0_7] : memref<32x64xf32, #tpu.memory_space<vmem>>, vector<32x64xf32>
    %cst = arith.constant dense<0.000000e+00> : vector<8x64xf32>
    %6 = tpu.matmul %0, %5, %cst {dimension_numbers = #tpu.dot_dimension_numbers<[1], [0], [0], [1], [0, 0, 1, 1], [], []>} : vector<8x32xf32>, vector<32x64xf32>, vector<8x64xf32> -> vector<8x64xf32>
    %7 = vector.broadcast %1 : vector<1x64xf32> to vector<8x64xf32>
    %8 = arith.addf %6, %7 : vector<8x64xf32>
    %cst_8 = arith.constant 0.000000e+00 : f32
    %9 = vector.broadcast %cst_8 : f32 to vector<8x64xf32>
    %10 = arith.maximumf %8, %9 : vector<8x64xf32>
    %c0_9 = arith.constant 0 : index
    %c0_10 = arith.constant 0 : index
    %11 = vector.load %arg3[%c0_9, %c0_10] : memref<64x64xf32, #tpu.memory_space<vmem>>, vector<64x64xf32>
    %cst_11 = arith.constant dense<0.000000e+00> : vector<8x64xf32>
    %12 = tpu.matmul %10, %11, %cst_11 {dimension_numbers = #tpu.dot_dimension_numbers<[1], [0], [0], [1], [0, 0, 1, 1], [], []>} : vector<8x64xf32>, vector<64x64xf32>, vector<8x64xf32> -> vector<8x64xf32>
    %c0_12 = arith.constant 0 : index
    %c0_13 = arith.constant 0 : index
    %13 = vector.load %arg4[%c0_12, %c0_13] : memref<32x64xf32, #tpu.memory_space<vmem>>, vector<32x64xf32>
    %cst_14 = arith.constant dense<0.000000e+00> : vector<8x64xf32>
    %14 = tpu.matmul %0, %13, %cst_14 {dimension_numbers = #tpu.dot_dimension_numbers<[1], [0], [0], [1], [0, 0, 1, 1], [], []>} : vector<8x32xf32>, vector<32x64xf32>, vector<8x64xf32> -> vector<8x64xf32>
    %15 = arith.addf %12, %14 : vector<8x64xf32>
    %16 = vector.broadcast %2 : vector<1x64xf32> to vector<8x64xf32>
    %17 = arith.addf %15, %16 : vector<8x64xf32>
    %cst_15 = arith.constant 0.000000e+00 : f32
    %18 = vector.broadcast %cst_15 : f32 to vector<8x64xf32>
    %19 = arith.maximumf %17, %18 : vector<8x64xf32>
    %c0_16 = arith.constant 0 : index
    %c0_17 = arith.constant 0 : index
    %20 = vector.load %arg5[%c0_16, %c0_17] : memref<64x64xf32, #tpu.memory_space<vmem>>, vector<64x64xf32>
    %cst_18 = arith.constant dense<0.000000e+00> : vector<8x64xf32>
    %21 = tpu.matmul %19, %20, %cst_18 {dimension_numbers = #tpu.dot_dimension_numbers<[1], [0], [0], [1], [0, 0, 1, 1], [], []>} : vector<8x64xf32>, vector<64x64xf32>, vector<8x64xf32> -> vector<8x64xf32>
    %22 = vector.broadcast %3 : vector<1x64xf32> to vector<8x64xf32>
    %23 = arith.addf %21, %22 : vector<8x64xf32>
    %cst_19 = arith.constant 0.000000e+00 : f32
    %24 = vector.broadcast %cst_19 : f32 to vector<8x64xf32>
    %25 = arith.maximumf %23, %24 : vector<8x64xf32>
    %c0_20 = arith.constant 0 : index
    %c0_21 = arith.constant 0 : index
    %26 = vector.load %arg6[%c0_20, %c0_21] : memref<64x2xf32, #tpu.memory_space<vmem>>, vector<64x2xf32>
    %cst_22 = arith.constant dense<0.000000e+00> : vector<8x2xf32>
    %27 = tpu.matmul %25, %26, %cst_22 {dimension_numbers = #tpu.dot_dimension_numbers<[1], [0], [0], [1], [0, 0, 1, 1], [], []>} : vector<8x64xf32>, vector<64x2xf32>, vector<8x2xf32> -> vector<8x2xf32>
    %28 = vector.broadcast %4 : vector<1x2xf32> to vector<8x2xf32>
    %29 = arith.addf %27, %28 : vector<8x2xf32>
    %c0_23 = arith.constant 0 : index
    %c0_24 = arith.constant 0 : index
    %30 = vector.load %arg8[%c0_23, %c0_24] : memref<8x2xf32, #tpu.memory_space<vmem>>, vector<8x2xf32>
    tpu.vector_store %arg8[%c0_23, %c0_24], %29 {strides = array<i32>} : memref<8x2xf32, #tpu.memory_space<vmem>>, vector<8x2xf32>,
    return
  }
  func.func @transform_0(%arg0: i32) -> (i32, i32) {
    %c0_i32 = arith.constant 0 : i32
    %c0_i32_0 = arith.constant 0 : i32
    return %arg0, %c0_i32 : i32, i32
  }
  func.func @transform_1(%arg0: i32) -> (i32, i32) {
    %c0_i32 = arith.constant 0 : i32
    %c0_i32_0 = arith.constant 0 : i32
    %c0_i32_1 = arith.constant 0 : i32
    return %c0_i32, %c0_i32_0 : i32, i32
  }
  func.func @transform_2(%arg0: i32) -> (i32, i32) {
    %c0_i32 = arith.constant 0 : i32
    %c0_i32_0 = arith.constant 0 : i32
    %c0_i32_1 = arith.constant 0 : i32
    return %c0_i32, %c0_i32_0 : i32, i32
  }
  func.func @transform_3(%arg0: i32) -> (i32, i32) {
    %c0_i32 = arith.constant 0 : i32
    %c0_i32_0 = arith.constant 0 : i32
    %c0_i32_1 = arith.constant 0 : i32
    return %c0_i32, %c0_i32_0 : i32, i32
  }
  func.func @transform_4(%arg0: i32) -> (i32, i32) {
    %c0_i32 = arith.constant 0 : i32
    %c0_i32_0 = arith.constant 0 : i32
    %c0_i32_1 = arith.constant 0 : i32
    return %c0_i32, %c0_i32_0 : i32, i32
  }
  func.func @transform_5(%arg0: i32) -> (i32, i32) {
    %c0_i32 = arith.constant 0 : i32
    %c0_i32_0 = arith.constant 0 : i32
    %c0_i32_1 = arith.constant 0 : i32
    return %c0_i32, %c0_i32_0 : i32, i32
  }
  func.func @transform_6(%arg0: i32) -> (i32, i32) {
    %c0_i32 = arith.constant 0 : i32
    %c0_i32_0 = arith.constant 0 : i32
    %c0_i32_1 = arith.constant 0 : i32
    return %c0_i32, %c0_i32_0 : i32, i32
  }
  func.func @transform_7(%arg0: i32) -> (i32, i32) {
    %c0_i32 = arith.constant 0 : i32
    %c0_i32_0 = arith.constant 0 : i32
    return %arg0, %c0_i32 : i32, i32
  }
}

</mosaic_0001>

<llo_original>
// kernel: tpu_custom_call.1
$region0: #{tpu_custom_call.1}
  #allocation0 [shape = 'u32[]', space=smem, size = 0x4, offset = 0x4, fixed_abs, tag = 'smem constant byte address 0x4 - core index']
  #allocation1 [shape = 'u32[144,128]{1,0:T(1,128)}', space=vmem, size = 0x12000, scoped, tag = 'internal scratch']
  %s0 = inlined_call_operand.vmem [shape: f32[8,32], index: 0, kind: input, shape index: {}]
  %s1 = inlined_call_operand.hbm [shape: f32[32,64], index: 1, kind: input, shape index: {}]
  %s2 = inlined_call_operand.vmem [shape: f32[64,64], index: 2, kind: input, shape index: {}]
  %s3 = inlined_call_operand.hbm [shape: f32[32,64], index: 3, kind: input, shape index: {}]
  %s4 = inlined_call_operand.hbm [shape: f32[64,64], index: 4, kind: input, shape index: {}]
  %s5 = inlined_call_operand.vmem [shape: f32[64,2], index: 5, kind: input, shape index: {}]
  %s6 = inlined_call_operand.vmem [shape: f32[4,64], index: 6, kind: input, shape index: {}]
  %s7 = inlined_call_operand.vmem [shape: f32[8,2], index: 7, kind: output, shape index: {}]
  %s8 = sld [smem:[#allocation0]]
  $region50: #{tpu_custom_call.1} parent=0
    _
  %s10 = ssub.s32 1, %s8
  %s11 = scalar_select 0, %s10, %s8
  $region1: #{tpu_custom_call.1} parent=0
    #allocation2 [shape = 'u8[16384]{0}', space=vmem, size = 0x4000, scoped, tag = 'input window, operand 1, single buffered']
    #allocation3 [shape = 's32[1]{0}', space=sflag, size = 0x4, scoped, tag = 'scoped memory for tpu_custom_call.1']
    #allocation4 [shape = 'u8[16384]{0}', space=vmem, size = 0x4000, scoped, tag = 'input window, operand 3, single buffered']
    #allocation5 [shape = 's32[1]{0}', space=sflag, size = 0x4, scoped, tag = 'scoped memory for tpu_custom_call.1']
    #allocation6 [shape = 'u8[32768]{0}', space=vmem, size = 0x8000, scoped, tag = 'input window, operand 4, single buffered']
    %12 = vsyncpa [#allocation3], 0
    %13 = vsyncpa [#allocation5], 0
    // Predicated region
    $region2: #{tpu_custom_call.1} parent=1 // pred_check
      _
    $region3: #{tpu_custom_call.1} parent=1 // pred_check_branch
      %15 = sbr.rel (0) target = $region5
    $region4: #{tpu_custom_call.1} parent=1 // pred_region
      _
    $region5: #{tpu_custom_call.1} parent=1 // pred_fallthru
      _
    // Predicated region
    $region6: #{tpu_custom_call.1} parent=1 // pred_check
      _
    $region7: #{tpu_custom_call.1} parent=1 // pred_check_branch
      %17 = sbr.rel (0) target = $region9
    $region8: #{tpu_custom_call.1} parent=1 // pred_region
      %s19 = ssub.s32 512, 512
      %20 = vsyncadd [#allocation3], %s19
      %s21 = sshll.u32 [#allocation2], 4
      %s22 = int_to_ptr.vmem [resolvable:$true] %s21
      %27 = dma.hbm_to_vmem [thread:$0]  %s1, 512, %s22, [#allocation3], 128, 128, 8
    $region9: #{tpu_custom_call.1} parent=1 // pred_fallthru
      _
    // Predicated region
    $region10: #{tpu_custom_call.1} parent=1 // pred_check
      _
    $region11: #{tpu_custom_call.1} parent=1 // pred_check_branch
      %29 = sbr.rel (0) target = $region13
    $region12: #{tpu_custom_call.1} parent=1 // pred_region
      _
    $region13: #{tpu_custom_call.1} parent=1 // pred_fallthru
      _
    // Predicated region
    $region14: #{tpu_custom_call.1} parent=1 // pred_check
      _
    $region15: #{tpu_custom_call.1} parent=1 // pred_check_branch
      %31 = sbr.rel (0) target = $region17
    $region16: #{tpu_custom_call.1} parent=1 // pred_region
      %s33 = ssub.s32 512, 512
      %34 = vsyncadd [#allocation5], %s33
      %s35 = sshll.u32 [#allocation4], 4
      %s36 = int_to_ptr.vmem [resolvable:$true] %s35
      %41 = dma.hbm_to_vmem [thread:$0]  %s3, 512, %s36, [#allocation5], 128, 128, 8
    $region17: #{tpu_custom_call.1} parent=1 // pred_fallthru
      _
    // Predicated region
    $region18: #{tpu_custom_call.1} parent=1 // pred_check
      _
    $region19: #{tpu_custom_call.1} parent=1 // pred_check_branch
      %43 = sbr.rel (0) target = $region21
    $region20: #{tpu_custom_call.1} parent=1 // pred_region
      %s45 = ssub.s32 1024, 1024
      %46 = vsyncadd [#allocation5], %s45
      %s47 = sshll.u32 [#allocation6], 4
      %s48 = int_to_ptr.vmem [resolvable:$true] %s47
      %53 = dma.hbm_to_vmem [thread:$0]  %s4, 1024, %s48, [#allocation5], 128, 128, 8
    $region21: #{tpu_custom_call.1} parent=1 // pred_fallthru
      _
    // Predicated region
    $region22: #{tpu_custom_call.1} parent=1 // pred_check
      _
    $region23: #{tpu_custom_call.1} parent=1 // pred_check_branch
      %55 = sbr.rel (0) target = $region25
    $region24: #{tpu_custom_call.1} parent=1 // pred_region
      _
    $region25: #{tpu_custom_call.1} parent=1 // pred_fallthru
      _
    // Predicated region
    $region26: #{tpu_custom_call.1} parent=1 // pred_check
      _
    $region27: #{tpu_custom_call.1} parent=1 // pred_check_branch
      %57 = sbr.rel (0) target = $region29
    $region28: #{tpu_custom_call.1} parent=1 // pred_region
      _
    $region29: #{tpu_custom_call.1} parent=1 // pred_fallthru
      _
    // Predicated region
    $region30: #{tpu_custom_call.1} parent=1 // pred_check
      _
    $region31: #{tpu_custom_call.1} parent=1 // pred_check_branch
      %59 = sbr.rel (0) target = $region33
    $region32: #{tpu_custom_call.1} parent=1 // pred_region
      %60 = dma.done [#allocation3], 512
    $region33: #{tpu_custom_call.1} parent=1 // pred_fallthru
      _
    // Predicated region
    $region34: #{tpu_custom_call.1} parent=1 // pred_check
      _
    $region35: #{tpu_custom_call.1} parent=1 // pred_check_branch
      %62 = sbr.rel (0) target = $region37
    $region36: #{tpu_custom_call.1} parent=1 // pred_region
      %63 = dma.done [#allocation5], 512
    $region37: #{tpu_custom_call.1} parent=1 // pred_fallthru
      _
    // Predicated region
    $region38: #{tpu_custom_call.1} parent=1 // pred_check
      _
    $region39: #{tpu_custom_call.1} parent=1 // pred_check_branch
      %65 = sbr.rel (0) target = $region41
    $region40: #{tpu_custom_call.1} parent=1 // pred_region
      %66 = dma.done [#allocation5], 1024
    $region41: #{tpu_custom_call.1} parent=1 // pred_fallthru
      _
    %v67 = vld [vmem:[%s0] sm:$0xff]
    %v68 = vld [vmem:[%s6] sm:$0x1]
    %v69 = vld [vmem:[%s6 + $0x1] sm:$0x1]
    %v70 = vld [vmem:[%s6 + $0x2] sm:$0x1]
    %v71 = vld [vmem:[%s6 + $0x3] sm:$0x1]
    %v72 = vld [vmem:[#allocation2] sm:$0xff]
    %v73 = vld [vmem:[#allocation2 + $0x8] sm:$0xff]
    %v74 = vld [vmem:[#allocation2 + $0x10] sm:$0xff]
    %v75 = vld [vmem:[#allocation2 + $0x18] sm:$0xff]
    %v76 = vlaneseq
    %v77 = vshrl.u32 %v76, 7
    %v78 = vsub.s32 0, %v77
    %v79 = vrot.slane %v68, %v78
    %vm80 = vcmask 261120
    %v82 = vsel %vm80, %v67, 0
    %84 = vmatprep.subr.mxu0 0.0
    %85 = vmatpush1.msra.mxu0 %v72
    %86 = vmatprep.subr.mxu0 0.0
    %87 = vmatpush1.msra.mxu0 %v73
    %88 = vmatprep.subr.mxu0 0.0
    %89 = vmatpush1.msra.mxu0 %v74
    %90 = vmatprep.subr.mxu0 0.0
    %91 = vmatpush1.msra.mxu0 %v75
    %92 = vmatprep.subr.mxu0 0.0
    %93 = vmatpush1.msra.mxu0 0.0
    %94 = vmatprep.subr.mxu0 0.0
    %95 = vmatpush1.msra.mxu0 0.0
    %96 = vmatprep.subr.mxu0 0.0
    %97 = vmatpush1.msra.mxu0 0.0
    %98 = vmatprep.subr.mxu0 0.0
    %99 = vmatpush1.msra.mxu0 0.0
    %100 = vmatprep.subr.mxu0 0.0
    %101 = vmatpush1.msra.mxu0 0.0
    %102 = vmatprep.subr.mxu0 0.0
    %103 = vmatpush1.msra.mxu0 0.0
    %104 = vmatprep.subr.mxu0 0.0
    %105 = vmatpush1.msra.mxu0 0.0
    %106 = vmatprep.subr.mxu0 0.0
    %107 = vmatpush1.msra.mxu0 0.0
    %108 = vmatprep.subr.mxu0 0.0
    %109 = vmatpush1.msra.mxu0 0.0
    %110 = vmatprep.subr.mxu0 0.0
    %111 = vmatpush1.msra.mxu0 0.0
    %112 = vmatprep.subr.mxu0 0.0
    %113 = vmatpush1.msra.mxu0 0.0
    %114 = vmatprep.subr.mxu0 0.0
    %115 = vmatpush1.msra.mxu0 0.0
    %116 = vmatprep.subr.mxu0 0.0
    %117 = vmatpush1.msra.mxu0 0.0
    %118 = vmatprep.subr.mxu0 0.0
    %119 = vmatpush1.msra.mxu0 0.0
    %120 = vmatprep.subr.mxu0 0.0
    %121 = vmatpush1.msra.mxu0 0.0
    %122 = vmatprep.subr.mxu0 0.0
    %123 = vmatpush1.msra.mxu0 0.0
    %124 = vmatprep.subr.mxu0 0.0
    %125 = vmatpush1.msra.mxu0 0.0
    %126 = vmatprep.subr.mxu0 0.0
    %127 = vmatpush1.msra.mxu0 0.0
    %128 = vmatprep.subr.mxu0 0.0
    %129 = vmatpush1.msra.mxu0 0.0
    %130 = vmatprep.subr.mxu0 0.0
    %131 = vmatpush1.msra.mxu0 0.0
    %132 = vmatprep.subr.mxu0 0.0
    %133 = vmatpush1.msra.mxu0 0.0
    %134 = vmatprep.subr.mxu0 0.0
    %135 = vmatpush1.msra.mxu0 0.0
    %136 = vmatprep.subr.mxu0 0.0
    %137 = vmatpush1.msra.mxu0 0.0
    %138 = vmatprep.subr.mxu0 0.0
    %139 = vmatpush1.msra.mxu0 0.0
    %140 = vmatprep.subr.mxu0 0.0
    %141 = vmatpush1.msra.mxu0 0.0
    %142 = vmatprep.subr.mxu0 0.0
    %143 = vmatpush1.msra.mxu0 0.0
    %144 = vmatprep.subr.mxu0 0.0
    %145 = vmatpush1.msra.mxu0 0.0
    %146 = vmatprep.subr.mxu0 0.0
    %147 = vmatpush1.msra.mxu0 0.0
    %148 = vmatprep.mubr.f32.mxu0 0.0
    %149 = vmatmul.mubr.f32.gmra.mrb[0].mxu0 %v82
    %v150 = vpop.f32.mrb[0].mxu0
    %v151 = vadd.f32 %v79, %v150
    %v152 = vpop.f32.mrb[0].mxu0
    %153 = vdwg.mxu0
    %v154 = vmax.f32 %v151, 0.0
    %v155 = vld [vmem:[%s2] sm:$0xff]
    %v156 = vld [vmem:[%s2 + $0x8] sm:$0xff]
    %v157 = vld [vmem:[%s2 + $0x10] sm:$0xff]
    %v158 = vld [vmem:[%s2 + $0x18] sm:$0xff]
    %v159 = vld [vmem:[%s2 + $0x20] sm:$0xff]
    %v160 = vld [vmem:[%s2 + $0x28] sm:$0xff]
    %v161 = vld [vmem:[%s2 + $0x30] sm:$0xff]
    %v162 = vld [vmem:[%s2 + $0x38] sm:$0xff]
    %v163 = vld [vmem:[#allocation4] sm:$0xff]
    %v164 = vld [vmem:[#allocation4 + $0x8] sm:$0xff]
    %v165 = vld [vmem:[#allocation4 + $0x10] sm:$0xff]
    %v166 = vld [vmem:[#allocation4 + $0x18] sm:$0xff]
    %167 = vmatprep.subr.mxu0 0.0
    %168 = vmatpush1.msra.mxu0 %v163
    %169 = vmatprep.subr.mxu0 0.0
    %170 = vmatpush1.msra.mxu0 %v164
    %171 = vmatprep.subr.mxu0 0.0
    %172 = vmatpush1.msra.mxu0 %v165
    %173 = vmatprep.subr.mxu0 0.0
    %174 = vmatpush1.msra.mxu0 %v166
    %175 = vmatprep.subr.mxu0 0.0
    %176 = vmatpush1.msra.mxu0 0.0
    %177 = vmatprep.subr.mxu0 0.0
    %178 = vmatpush1.msra.mxu0 0.0
    %179 = vmatprep.subr.mxu0 0.0
    %180 = vmatpush1.msra.mxu0 0.0
    %181 = vmatprep.subr.mxu0 0.0
    %182 = vmatpush1.msra.mxu0 0.0
    %183 = vmatprep.subr.mxu0 0.0
    %184 = vmatpush1.msra.mxu0 0.0
    %185 = vmatprep.subr.mxu0 0.0
    %186 = vmatpush1.msra.mxu0 0.0
    %187 = vmatprep.subr.mxu0 0.0
    %188 = vmatpush1.msra.mxu0 0.0
    %189 = vmatprep.subr.mxu0 0.0
    %190 = vmatpush1.msra.mxu0 0.0
    %191 = vmatprep.subr.mxu0 0.0
    %192 = vmatpush1.msra.mxu0 0.0
    %193 = vmatprep.subr.mxu0 0.0
    %194 = vmatpush1.msra.mxu0 0.0
    %195 = vmatprep.subr.mxu0 0.0
    %196 = vmatpush1.msra.mxu0 0.0
    %197 = vmatprep.subr.mxu0 0.0
    %198 = vmatpush1.msra.mxu0 0.0
    %199 = vmatprep.subr.mxu0 0.0
    %200 = vmatpush1.msra.mxu0 0.0
    %201 = vmatprep.subr.mxu0 0.0
    %202 = vmatpush1.msra.mxu0 0.0
    %203 = vmatprep.subr.mxu0 0.0
    %204 = vmatpush1.msra.mxu0 0.0
    %205 = vmatprep.subr.mxu0 0.0
    %206 = vmatpush1.msra.mxu0 0.0
    %207 = vmatprep.subr.mxu0 0.0
    %208 = vmatpush1.msra.mxu0 0.0
    %209 = vmatprep.subr.mxu0 0.0
    %210 = vmatpush1.msra.mxu0 0.0
    %211 = vmatprep.subr.mxu0 0.0
    %212 = vmatpush1.msra.mxu0 0.0
    %213 = vmatprep.subr.mxu0 0.0
    %214 = vmatpush1.msra.mxu0 0.0
    %215 = vmatprep.subr.mxu0 0.0
    %216 = vmatpush1.msra.mxu0 0.0
    %217 = vmatprep.subr.mxu0 0.0
    %218 = vmatpush1.msra.mxu0 0.0
    %219 = vmatprep.subr.mxu0 0.0
    %220 = vmatpush1.msra.mxu0 0.0
    %221 = vmatprep.subr.mxu0 0.0
    %222 = vmatpush1.msra.mxu0 0.0
    %223 = vmatprep.subr.mxu0 0.0
    %224 = vmatpush1.msra.mxu0 0.0
    %225 = vmatprep.subr.mxu0 0.0
    %226 = vmatpush1.msra.mxu0 0.0
    %227 = vmatprep.subr.mxu0 0.0
    %228 = vmatpush1.msra.mxu0 0.0
    %229 = vmatprep.subr.mxu0 0.0
    %230 = vmatpush1.msra.mxu0 0.0
    %231 = vmatprep.mubr.f32.mxu0 0.0
    %232 = vmatmul.mubr.f32.gmra.mrb[0].mxu0 %v82
    %v233 = vpop.f32.mrb[0].mxu0
    %v234 = vadd.f32 0.0, %v233
    %v235 = vpop.f32.mrb[0].mxu0
    %236 = vdwg.mxu0
    %vm237 = vcmask 523264
    %v239 = vsel %vm237, %v154, 0
    %241 = vmatprep.subr.mxu0 0.0
    %242 = vmatpush1.msra.mxu0 %v155
    %243 = vmatprep.subr.mxu0 0.0
    %244 = vmatpush1.msra.mxu0 %v156
    %245 = vmatprep.subr.mxu0 0.0
    %246 = vmatpush1.msra.mxu0 %v157
    %247 = vmatprep.subr.mxu0 0.0
    %248 = vmatpush1.msra.mxu0 %v158
    %249 = vmatprep.subr.mxu0 0.0
    %250 = vmatpush1.msra.mxu0 %v159
    %251 = vmatprep.subr.mxu0 0.0
    %252 = vmatpush1.msra.mxu0 %v160
    %253 = vmatprep.subr.mxu0 0.0
    %254 = vmatpush1.msra.mxu0 %v161
    %255 = vmatprep.subr.mxu0 0.0
    %256 = vmatpush1.msra.mxu0 %v162
    %257 = vmatprep.subr.mxu0 0.0
    %258 = vmatpush1.msra.mxu0 0.0
    %259 = vmatprep.subr.mxu0 0.0
    %260 = vmatpush1.msra.mxu0 0.0
    %261 = vmatprep.subr.mxu0 0.0
    %262 = vmatpush1.msra.mxu0 0.0
    %263 = vmatprep.subr.mxu0 0.0
    %264 = vmatpush1.msra.mxu0 0.0
    %265 = vmatprep.subr.mxu0 0.0
    %266 = vmatpush1.msra.mxu0 0.0
    %267 = vmatprep.subr.mxu0 0.0
    %268 = vmatpush1.msra.mxu0 0.0
    %269 = vmatprep.subr.mxu0 0.0
    %270 = vmatpush1.msra.mxu0 0.0
    %271 = vmatprep.subr.mxu0 0.0
    %272 = vmatpush1.msra.mxu0 0.0
    %273 = vmatprep.subr.mxu0 0.0
    %274 = vmatpush1.msra.mxu0 0.0
    %275 = vmatprep.subr.mxu0 0.0
    %276 = vmatpush1.msra.mxu0 0.0
    %277 = vmatprep.subr.mxu0 0.0
    %278 = vmatpush1.msra.mxu0 0.0
    %279 = vmatprep.subr.mxu0 0.0
    %280 = vmatpush1.msra.mxu0 0.0
    %281 = vmatprep.subr.mxu0 0.0
    %282 = vmatpush1.msra.mxu0 0.0
    %283 = vmatprep.subr.mxu0 0.0
    %284 = vmatpush1.msra.mxu0 0.0
    %285 = vmatprep.subr.mxu0 0.0
    %286 = vmatpush1.msra.mxu0 0.0
    %287 = vmatprep.subr.mxu0 0.0
    %288 = vmatpush1.msra.mxu0 0.0
    %289 = vmatprep.subr.mxu0 0.0
    %290 = vmatpush1.msra.mxu0 0.0
    %291 = vmatprep.subr.mxu0 0.0
    %292 = vmatpush1.msra.mxu0 0.0
    %293 = vmatprep.subr.mxu0 0.0
    %294 = vmatpush1.msra.mxu0 0.0
    %295 = vmatprep.subr.mxu0 0.0
    %296 = vmatpush1.msra.mxu0 0.0
    %297 = vmatprep.subr.mxu0 0.0
    %298 = vmatpush1.msra.mxu0 0.0
    %299 = vmatprep.subr.mxu0 0.0
    %300 = vmatpush1.msra.mxu0 0.0
    %301 = vmatprep.subr.mxu0 0.0
    %302 = vmatpush1.msra.mxu0 0.0
    %303 = vmatprep.subr.mxu0 0.0
    %304 = vmatpush1.msra.mxu0 0.0
    %305 = vmatprep.mubr.f32.mxu0 0.0
    %306 = vmatmul.mubr.f32.gmra.mrb[0].mxu0 %v239
    %v307 = vpop.f32.mrb[0].mxu0
    %v308 = vadd.f32 %v234, %v307
    %v309 = vpop.f32.mrb[0].mxu0
    %310 = vdwg.mxu0
    %v311 = vlaneseq
    %v312 = vshrl.u32 %v311, 7
    %v313 = vsub.s32 0, %v312
    %v314 = vrot.slane %v69, %v313
    %v315 = vadd.f32 %v308, %v314
    %v316 = vmax.f32 %v315, 0.0
    %v317 = vld [vmem:[#allocation6] sm:$0xff]
    %v318 = vld [vmem:[#allocation6 + $0x8] sm:$0xff]
    %v319 = vld [vmem:[#allocation6 + $0x10] sm:$0xff]
    %v320 = vld [vmem:[#allocation6 + $0x18] sm:$0xff]
    %v321 = vld [vmem:[#allocation6 + $0x20] sm:$0xff]
    %v322 = vld [vmem:[#allocation6 + $0x28] sm:$0xff]
    %v323 = vld [vmem:[#allocation6 + $0x30] sm:$0xff]
    %v324 = vld [vmem:[#allocation6 + $0x38] sm:$0xff]
    %v325 = vlaneseq
    %v326 = vshrl.u32 %v325, 7
    %v327 = vsub.s32 0, %v326
    %v328 = vrot.slane %v70, %v327
    %v330 = vsel %vm237, %v316, 0
    %332 = vmatprep.subr.mxu0 0.0
    %333 = vmatpush1.msra.mxu0 %v317
    %334 = vmatprep.subr.mxu0 0.0
    %335 = vmatpush1.msra.mxu0 %v318
    %336 = vmatprep.subr.mxu0 0.0
    %337 = vmatpush1.msra.mxu0 %v319
    %338 = vmatprep.subr.mxu0 0.0
    %339 = vmatpush1.msra.mxu0 %v320
    %340 = vmatprep.subr.mxu0 0.0
    %341 = vmatpush1.msra.mxu0 %v321
    %342 = vmatprep.subr.mxu0 0.0
    %343 = vmatpush1.msra.mxu0 %v322
    %344 = vmatprep.subr.mxu0 0.0
    %345 = vmatpush1.msra.mxu0 %v323
    %346 = vmatprep.subr.mxu0 0.0
    %347 = vmatpush1.msra.mxu0 %v324
    %348 = vmatprep.subr.mxu0 0.0
    %349 = vmatpush1.msra.mxu0 0.0
    %350 = vmatprep.subr.mxu0 0.0
    %351 = vmatpush1.msra.mxu0 0.0
    %352 = vmatprep.subr.mxu0 0.0
    %353 = vmatpush1.msra.mxu0 0.0
    %354 = vmatprep.subr.mxu0 0.0
    %355 = vmatpush1.msra.mxu0 0.0
    %356 = vmatprep.subr.mxu0 0.0
    %357 = vmatpush1.msra.mxu0 0.0
    %358 = vmatprep.subr.mxu0 0.0
    %359 = vmatpush1.msra.mxu0 0.0
    %360 = vmatprep.subr.mxu0 0.0
    %361 = vmatpush1.msra.mxu0 0.0
    %362 = vmatprep.subr.mxu0 0.0
    %363 = vmatpush1.msra.mxu0 0.0
    %364 = vmatprep.subr.mxu0 0.0
    %365 = vmatpush1.msra.mxu0 0.0
    %366 = vmatprep.subr.mxu0 0.0
    %367 = vmatpush1.msra.mxu0 0.0
    %368 = vmatprep.subr.mxu0 0.0
    %369 = vmatpush1.msra.mxu0 0.0
    %370 = vmatprep.subr.mxu0 0.0
    %371 = vmatpush1.msra.mxu0 0.0
    %372 = vmatprep.subr.mxu0 0.0
    %373 = vmatpush1.msra.mxu0 0.0
    %374 = vmatprep.subr.mxu0 0.0
    %375 = vmatpush1.msra.mxu0 0.0
    %376 = vmatprep.subr.mxu0 0.0
    %377 = vmatpush1.msra.mxu0 0.0
    %378 = vmatprep.subr.mxu0 0.0
    %379 = vmatpush1.msra.mxu0 0.0
    %380 = vmatprep.subr.mxu0 0.0
    %381 = vmatpush1.msra.mxu0 0.0
    %382 = vmatprep.subr.mxu0 0.0
    %383 = vmatpush1.msra.mxu0 0.0
    %384 = vmatprep.subr.mxu0 0.0
    %385 = vmatpush1.msra.mxu0 0.0
    %386 = vmatprep.subr.mxu0 0.0
    %387 = vmatpush1.msra.mxu0 0.0
    %388 = vmatprep.subr.mxu0 0.0
    %389 = vmatpush1.msra.mxu0 0.0
    %390 = vmatprep.subr.mxu0 0.0
    %391 = vmatpush1.msra.mxu0 0.0
    %392 = vmatprep.subr.mxu0 0.0
    %393 = vmatpush1.msra.mxu0 0.0
    %394 = vmatprep.subr.mxu0 0.0
    %395 = vmatpush1.msra.mxu0 0.0
    %396 = vmatprep.mubr.f32.mxu0 0.0
    %397 = vmatmul.mubr.f32.gmra.mrb[0].mxu0 %v330
    %v398 = vpop.f32.mrb[0].mxu0
    %v399 = vadd.f32 %v328, %v398
    %v400 = vpop.f32.mrb[0].mxu0
    %401 = vdwg.mxu0
    %v402 = vmax.f32 %v399, 0.0
    %v403 = vld [vmem:[%s5] sm:$0xff]
    %v404 = vld [vmem:[%s5 + $0x8] sm:$0xff]
    %v405 = vld [vmem:[%s5 + $0x10] sm:$0xff]
    %v406 = vld [vmem:[%s5 + $0x18] sm:$0xff]
    %v407 = vld [vmem:[%s5 + $0x20] sm:$0xff]
    %v408 = vld [vmem:[%s5 + $0x28] sm:$0xff]
    %v409 = vld [vmem:[%s5 + $0x30] sm:$0xff]
    %v410 = vld [vmem:[%s5 + $0x38] sm:$0xff]
    %v411 = vlaneseq
    %v412 = vshrl.u32 %v411, 7
    %v413 = vsub.s32 0, %v412
    %v414 = vrot.slane %v71, %v413
    %v416 = vsel %vm237, %v402, 0
    %418 = vmatprep.subr.mxu0 0.0
    %419 = vmatpush1.msra.mxu0 %v403
    %420 = vmatprep.subr.mxu0 0.0
    %421 = vmatpush1.msra.mxu0 %v404
    %422 = vmatprep.subr.mxu0 0.0
    %423 = vmatpush1.msra.mxu0 %v405
    %424 = vmatprep.subr.mxu0 0.0
    %425 = vmatpush1.msra.mxu0 %v406
    %426 = vmatprep.subr.mxu0 0.0
    %427 = vmatpush1.msra.mxu0 %v407
    %428 = vmatprep.subr.mxu0 0.0
    %429 = vmatpush1.msra.mxu0 %v408
    %430 = vmatprep.subr.mxu0 0.0
    %431 = vmatpush1.msra.mxu0 %v409
    %432 = vmatprep.subr.mxu0 0.0
    %433 = vmatpush1.msra.mxu0 %v410
    %434 = vmatprep.subr.mxu0 0.0
    %435 = vmatpush1.msra.mxu0 0.0
    %436 = vmatprep.subr.mxu0 0.0
    %437 = vmatpush1.msra.mxu0 0.0
    %438 = vmatprep.subr.mxu0 0.0
    %439 = vmatpush1.msra.mxu0 0.0
    %440 = vmatprep.subr.mxu0 0.0
    %441 = vmatpush1.msra.mxu0 0.0
    %442 = vmatprep.subr.mxu0 0.0
    %443 = vmatpush1.msra.mxu0 0.0
    %444 = vmatprep.subr.mxu0 0.0
    %445 = vmatpush1.msra.mxu0 0.0
    %446 = vmatprep.subr.mxu0 0.0
    %447 = vmatpush1.msra.mxu0 0.0
    %448 = vmatprep.subr.mxu0 0.0
    %449 = vmatpush1.msra.mxu0 0.0
    %450 = vmatprep.subr.mxu0 0.0
    %451 = vmatpush1.msra.mxu0 0.0
    %452 = vmatprep.subr.mxu0 0.0
    %453 = vmatpush1.msra.mxu0 0.0
    %454 = vmatprep.subr.mxu0 0.0
    %455 = vmatpush1.msra.mxu0 0.0
    %456 = vmatprep.subr.mxu0 0.0
    %457 = vmatpush1.msra.mxu0 0.0
    %458 = vmatprep.subr.mxu0 0.0
    %459 = vmatpush1.msra.mxu0 0.0
    %460 = vmatprep.subr.mxu0 0.0
    %461 = vmatpush1.msra.mxu0 0.0
    %462 = vmatprep.subr.mxu0 0.0
    %463 = vmatpush1.msra.mxu0 0.0
    %464 = vmatprep.subr.mxu0 0.0
    %465 = vmatpush1.msra.mxu0 0.0
    %466 = vmatprep.subr.mxu0 0.0
    %467 = vmatpush1.msra.mxu0 0.0
    %468 = vmatprep.subr.mxu0 0.0
    %469 = vmatpush1.msra.mxu0 0.0
    %470 = vmatprep.subr.mxu0 0.0
    %471 = vmatpush1.msra.mxu0 0.0
    %472 = vmatprep.subr.mxu0 0.0
    %473 = vmatpush1.msra.mxu0 0.0
    %474 = vmatprep.subr.mxu0 0.0
    %475 = vmatpush1.msra.mxu0 0.0
    %476 = vmatprep.subr.mxu0 0.0
    %477 = vmatpush1.msra.mxu0 0.0
    %478 = vmatprep.subr.mxu0 0.0
    %479 = vmatpush1.msra.mxu0 0.0
    %480 = vmatprep.subr.mxu0 0.0
    %481 = vmatpush1.msra.mxu0 0.0
    %482 = vmatprep.mubr.f32.mxu0 0.0
    %483 = vmatmul.mubr.f32.gmra.mrb[0].mxu0 %v416
    %v484 = vpop.f32.mrb[0].mxu0
    %v485 = vadd.f32 %v414, %v484
    %v486 = vpop.f32.mrb[0].mxu0
    %487 = vdwg.mxu0
    %vm488 = vcmask 15360
    %489 = vst.msk [vmem:[%s7] sm:$0xff] %vm488, %v485
    // Predicated region
    $region42: #{tpu_custom_call.1} parent=1 // pred_check
      _
    $region43: #{tpu_custom_call.1} parent=1 // pred_check_branch
      %491 = sbr.rel (0) target = $region45
    $region44: #{tpu_custom_call.1} parent=1 // pred_region
      _
    $region45: #{tpu_custom_call.1} parent=1 // pred_fallthru
      _
    // Predicated region
    $region46: #{tpu_custom_call.1} parent=1 // pred_check
      _
    $region47: #{tpu_custom_call.1} parent=1 // pred_check_branch
      %493 = sbr.rel (0) target = $region49
    $region48: #{tpu_custom_call.1} parent=1 // pred_region
      _
    $region49: #{tpu_custom_call.1} parent=1 // pred_fallthru
      _
    %494 = vsyncpa [#allocation3], 1
    %495 = vsyncpa [#allocation5], 1

</llo_original>
